<compile_context>
chip_gen: v5e
topology: v5e:2x2
jax: 0.10.0
libtpu: 0.0.40
codegen_flags: <defaults>
</compile_context>

<pallas_src>
import jax
import jax.numpy as jnp
from jax.experimental import pallas as pl
from jax.experimental.pallas import tpu as pltpu

inDim = 20
hidDim = 10
labelNum = 2
batchSize = 2

_TB_CAP = 16384          # rows per grid step (multiple of 128), VMEM-safe on v5e/v6e/v7x
_SMALL_BATCH = 1024      # below this, XLA fusion beats any custom call


def _round_up(n, m):
    return ((n + m - 1) // m) * m


def _choose_tb(B):
    """Batch tile: multiple of 128, <= _TB_CAP, even #steps when B is large."""
    if B <= 256:
        return _round_up(B, 128)
    n = max(2, pl.cdiv(B, _TB_CAP))
    if n % 2:
        n += 1           # even step count -> both v7x TensorCores get tiles
    return _round_up(pl.cdiv(B, n), 128)


def mlp_kernel(x_ref, w1_ref, b1_ref, w2_ref, b2_ref, o_ref):
    # x_ref : [TB, inDim]       bf16  (natural row-major layout, no pre-transpose)
    # w1_ref: [hidDim, inDim]   bf16  (VMEM-resident via constant index_map)
    # b1_ref: [hidDim, 1]       f32
    # w2_ref: [labelNum, hidDim] bf16 (resident)
    # b2_ref: [labelNum, 1]     f32
    # o_ref : [labelNum, TB]    f32   (lane-dense output tile)

    # Layer 1 on the MXU: contract both operands over their inDim axis so the
    # batch-major x block is consumed directly (no wrapper-side data transpose).
    h = jax.lax.dot_general(
        w1_ref[...], x_ref[...],
        dimension_numbers=(((1,), (1,)), ((), ())),
        preferred_element_type=jnp.float32)                    # [hidDim, TB]
    h = jnp.maximum(h + b1_ref[...], 0.0)                      # bias + ReLU (VPU)

    # Layer 2 on the (otherwise idle) MXU: tiny [2,10] x [10,TB] dot, f32 acc.
    # bf16 operands match the kernel's layer-1 precision choice; keep f32
    # operands here if bit-closer parity to the f32 module is ever required.
    o = jnp.dot(w2_ref[...], h.astype(jnp.bfloat16),
                preferred_element_type=jnp.float32) + b2_ref[...]
    o_ref[...] = o.astype(o_ref.dtype)


def _xla_forward(x, w1, b1, w2, b2):
    """Small-batch bypass, precision-matched to the Pallas path."""
    h = jnp.maximum(
        jax.lax.dot_general(x.astype(jnp.bfloat16), w1.astype(jnp.bfloat16),
                            (((1,), (1,)), ((), ())),
                            preferred_element_type=jnp.float32) + b1, 0.0)
    o = jax.lax.dot_general(h.astype(jnp.bfloat16), w2.astype(jnp.bfloat16),
                            (((1,), (1,)), ((), ())),
                            preferred_element_type=jnp.float32) + b2
    return o


def test_d_forward(x, w1, b1, w2, b2, *, force_pallas=False):
    """x: [B, inDim] (f32 or bf16).  Weights in PyTorch layout:
    w1 [hidDim, inDim], b1 [hidDim], w2 [labelNum, hidDim], b2 [labelNum]."""
    B = x.shape[0]
    if B < _SMALL_BATCH and not force_pallas:
        return _xla_forward(x, w1, b1, w2, b2)

    TB = _choose_tb(B)
    B_pad = _round_up(B, TB)
    grid = (B_pad // TB,)

    # bf16 input stream; pad only when B is not a tile multiple (cast+pad fuse).
    xb = x.astype(jnp.bfloat16)
    if B_pad != B:
        xb = jnp.pad(xb, ((0, B_pad - B), (0, 0)))
    w1b = w1.astype(jnp.bfloat16)
    w2b = w2.astype(jnp.bfloat16)
    b1c = b1.reshape(hidDim, 1).astype(jnp.float32)
    b2c = b2.reshape(labelNum, 1).astype(jnp.float32)

    out_t = pl.pallas_call(
        mlp_kernel,
        out_shape=jax.ShapeDtypeStruct((labelNum, B_pad), jnp.float32),
        grid_spec=pltpu.PrefetchScalarGridSpec(
            num_scalar_prefetch=0,
            grid=grid,
            in_specs=[
                # streamed batch tile, natural [B, inDim] layout
                pl.BlockSpec((TB, inDim), lambda i: (i, 0)),
                # parameters: constant block index -> stay VMEM-resident
                pl.BlockSpec((hidDim, inDim), lambda i: (0, 0)),
                pl.BlockSpec((hidDim, 1), lambda i: (0, 0)),
                pl.BlockSpec((labelNum, hidDim), lambda i: (0, 0)),
                pl.BlockSpec((labelNum, 1), lambda i: (0, 0)),
            ],
            out_specs=pl.BlockSpec((labelNum, TB), lambda i: (0, i)),
        ),
        compiler_params=pltpu.CompilerParams(
            # independent batch tiles -> shard across v7x's two TensorCores
            dimension_semantics=("parallel",),
            vmem_limit_bytes=32 * 1024 * 1024,
        ),
    )(xb, w1b, b1c, w2b, b2c)

    # Padded batch columns hold relu(b1)-derived garbage; the [:, :B] slice
    # below is what makes the padded layout correct — keep it.
    return out_t[:, :B].T                                       # [B, labelNum]


def init_params(key):
    # nn.Linear default init: U(-1/sqrt(fan_in), +1/sqrt(fan_in)), PyTorch layout.
    k1, k2, k3, k4 = jax.random.split(key, 4)
    bound1 = 1.0 / jnp.sqrt(jnp.float32(inDim))
    bound2 = 1.0 / jnp.sqrt(jnp.float32(hidDim))
    w1 = jax.random.uniform(k1, (hidDim, inDim), jnp.float32, -bound1, bound1)
    b1 = jax.random.uniform(k2, (hidDim,), jnp.float32, -bound1, bound1)
    w2 = jax.random.uniform(k3, (labelNum, hidDim), jnp.float32, -bound2, bound2)
    b2 = jax.random.uniform(k4, (labelNum,), jnp.float32, -bound2, bound2)
    return w1, b1, w2, b2


if __name__ == "__main__":
    key = jax.random.PRNGKey(0)
    kx, kp = jax.random.split(key)
    x = jax.random.normal(kx, (batchSize, inDim), jnp.float32)
    w1, b1, w2, b2 = init_params(kp)

    # Normal path at batch=2 takes the XLA bypass (dispatch-bound regime).
    out = jax.block_until_ready(test_d_forward(x, w1, b1, w2, b2))
    assert out.shape == (batchSize, labelNum)

    # Force the Pallas kernel at the same tiny shape to verify it end-to-end.
    out_k = jax.block_until_ready(
        test_d_forward(x, w1, b1, w2, b2, force_pallas=True))
    assert out_k.shape == (batchSize, labelNum)

    # Matched-precision reference (bf16 operands, f32 accumulation, both layers).
    h_m = jnp.maximum(
        jnp.dot(x.astype(jnp.bfloat16), w1.T.astype(jnp.bfloat16),
                preferred_element_type=jnp.float32) + b1, 0.0)
    ref_m = jnp.dot(h_m.astype(jnp.bfloat16), w2.T.astype(jnp.bfloat16),
                    preferred_element_type=jnp.float32) + b2
    assert jnp.allclose(out, ref_m, atol=1e-4, rtol=1e-4)
    assert jnp.allclose(out_k, ref_m, atol=1e-4, rtol=1e-4)

    # Full-f32 module semantics: bf16 operands stay well within tolerance.
    ref_f = jnp.maximum(x @ w1.T + b1, 0.0) @ w2.T + b2
    assert jnp.allclose(out_k, ref_f, atol=5e-2, rtol=0)
    assert jnp.allclose(out, ref_f, atol=5e-2, rtol=0)

    print("KERNEL_OK")
</pallas_src>

<mosaic_0001>
module attributes {stable_mosaic.version = 11 : i64} {
  func.func @mlp_kernel(%arg0: i32, %arg1: memref<128x20xbf16, #tpu.memory_space<vmem>>, %arg2: memref<10x20xbf16, #tpu.memory_space<vmem>>, %arg3: memref<10x1xf32, #tpu.memory_space<vmem>>, %arg4: memref<2x10xbf16, #tpu.memory_space<vmem>>, %arg5: memref<2x1xf32, #tpu.memory_space<vmem>>, %arg6: memref<2x128xf32, #tpu.memory_space<vmem>>) attributes {dimension_semantics = [#tpu.dimension_semantics<parallel>], iteration_bounds = array<i64: 1>, scalar_prefetch = 0 : i64, scratch_operands = 0 : i64, tpu.core_type = #tpu.core_type<tc>, window_params = [{transform_indices = @transform_0, window_bounds = array<i64: 128, 20>}, {pipeline_mode = #tpu.pipeline_mode<synchronous>, transform_indices = @transform_1, window_bounds = array<i64: 10, 20>}, {pipeline_mode = #tpu.pipeline_mode<synchronous>, transform_indices = @transform_2, window_bounds = array<i64: 10, 1>}, {pipeline_mode = #tpu.pipeline_mode<synchronous>, transform_indices = @transform_3, window_bounds = array<i64: 2, 10>}, {pipeline_mode = #tpu.pipeline_mode<synchronous>, transform_indices = @transform_4, window_bounds = array<i64: 2, 1>}, {transform_indices = @transform_5, window_bounds = array<i64: 2, 128>}]} {
    %c0 = arith.constant 0 : index
    %c0_0 = arith.constant 0 : index
    %0 = vector.load %arg2[%c0, %c0_0] : memref<10x20xbf16, #tpu.memory_space<vmem>>, vector<10x20xbf16>
    %c0_1 = arith.constant 0 : index
    %c0_2 = arith.constant 0 : index
    %1 = vector.load %arg1[%c0_1, %c0_2] : memref<128x20xbf16, #tpu.memory_space<vmem>>, vector<128x20xbf16>
    %cst = arith.constant dense<0.000000e+00> : vector<10x128xf32>
    %2 = tpu.matmul %0, %1, %cst {dimension_numbers = #tpu.dot_dimension_numbers<[1], [1], [0], [0], [0, 0, 1, 0], [], []>} : vector<10x20xbf16>, vector<128x20xbf16>, vector<10x128xf32> -> vector<10x128xf32>
    %c0_3 = arith.constant 0 : index
    %c0_4 = arith.constant 0 : index
    %3 = vector.load %arg3[%c0_3, %c0_4] : memref<10x1xf32, #tpu.memory_space<vmem>>, vector<10x1xf32>
    %4 = vector.broadcast %3 : vector<10x1xf32> to vector<10x128xf32>
    %5 = arith.addf %2, %4 : vector<10x128xf32>
    %cst_5 = arith.constant 0.000000e+00 : f32
    %6 = vector.broadcast %cst_5 : f32 to vector<10x128xf32>
    %7 = arith.maximumf %5, %6 : vector<10x128xf32>
    %c0_6 = arith.constant 0 : index
    %c0_7 = arith.constant 0 : index
    %8 = vector.load %arg4[%c0_6, %c0_7] : memref<2x10xbf16, #tpu.memory_space<vmem>>, vector<2x10xbf16>
    %9 = arith.truncf %7 : vector<10x128xf32> to vector<10x128xbf16>
    %cst_8 = arith.constant dense<0.000000e+00> : vector<2x128xf32>
    %10 = tpu.matmul %8, %9, %cst_8 {dimension_numbers = #tpu.dot_dimension_numbers<[1], [0], [0], [1], [0, 0, 1, 1], [], []>} : vector<2x10xbf16>, vector<10x128xbf16>, vector<2x128xf32> -> vector<2x128xf32>
    %c0_9 = arith.constant 0 : index
    %c0_10 = arith.constant 0 : index
    %11 = vector.load %arg5[%c0_9, %c0_10] : memref<2x1xf32, #tpu.memory_space<vmem>>, vector<2x1xf32>
    %12 = vector.broadcast %11 : vector<2x1xf32> to vector<2x128xf32>
    %13 = arith.addf %10, %12 : vector<2x128xf32>
    %c0_11 = arith.constant 0 : index
    %c0_12 = arith.constant 0 : index
    %14 = vector.load %arg6[%c0_11, %c0_12] : memref<2x128xf32, #tpu.memory_space<vmem>>, vector<2x128xf32>
    tpu.vector_store %arg6[%c0_11, %c0_12], %13 {strides = array<i32>} : memref<2x128xf32, #tpu.memory_space<vmem>>, vector<2x128xf32>,
    return
  }
  func.func @transform_0(%arg0: i32) -> (i32, i32) {
    %c0_i32 = arith.constant 0 : i32
    %c0_i32_0 = arith.constant 0 : i32
    return %arg0, %c0_i32 : i32, i32
  }
  func.func @transform_1(%arg0: i32) -> (i32, i32) {
    %c0_i32 = arith.constant 0 : i32
    %c0_i32_0 = arith.constant 0 : i32
    %c0_i32_1 = arith.constant 0 : i32
    return %c0_i32, %c0_i32_0 : i32, i32
  }
  func.func @transform_2(%arg0: i32) -> (i32, i32) {
    %c0_i32 = arith.constant 0 : i32
    %c0_i32_0 = arith.constant 0 : i32
    %c0_i32_1 = arith.constant 0 : i32
    return %c0_i32, %c0_i32_0 : i32, i32
  }
  func.func @transform_3(%arg0: i32) -> (i32, i32) {
    %c0_i32 = arith.constant 0 : i32
    %c0_i32_0 = arith.constant 0 : i32
    %c0_i32_1 = arith.constant 0 : i32
    return %c0_i32, %c0_i32_0 : i32, i32
  }
  func.func @transform_4(%arg0: i32) -> (i32, i32) {
    %c0_i32 = arith.constant 0 : i32
    %c0_i32_0 = arith.constant 0 : i32
    %c0_i32_1 = arith.constant 0 : i32
    return %c0_i32, %c0_i32_0 : i32, i32
  }
  func.func @transform_5(%arg0: i32) -> (i32, i32) {
    %c0_i32 = arith.constant 0 : i32
    %c0_i32_0 = arith.constant 0 : i32
    return %c0_i32, %arg0 : i32, i32
  }
}

</mosaic_0001>

<llo_original>
// kernel: tpu_custom_call.1
$region0: #{tpu_custom_call.1}
  #allocation0 [shape = 'u32[]', space=smem, size = 0x4, offset = 0x4, fixed_abs, tag = 'smem constant byte address 0x4 - core index']
  #allocation1 [shape = 'u32[72,128]{1,0:T(1,128)}', space=vmem, size = 0x9000, scoped, tag = 'internal scratch']
  %s0 = inlined_call_operand.vmem [shape: bf16[128,20], index: 0, kind: input, shape index: {}]
  %s1 = inlined_call_operand.vmem [shape: bf16[10,20], index: 1, kind: input, shape index: {}]
  %s2 = inlined_call_operand.vmem [shape: f32[10,1], index: 2, kind: input, shape index: {}]
  %s3 = inlined_call_operand.vmem [shape: bf16[2,10], index: 3, kind: input, shape index: {}]
  %s4 = inlined_call_operand.vmem [shape: f32[2,1], index: 4, kind: input, shape index: {}]
  %s5 = inlined_call_operand.hbm [shape: f32[2,128], index: 5, kind: output, shape index: {}]
  %s6 = sld [smem:[#allocation0]]
  $region30: #{tpu_custom_call.1} parent=0
    _
  %s8 = ssub.s32 1, %s6
  %s9 = scalar_select 0, %s8, %s6
  $region1: #{tpu_custom_call.1} parent=0
    #allocation2 [shape = 'u8[1024]{0}', space=vmem, size = 0x400, scoped, tag = 'output window, operand 0, single buffered']
    #allocation3 [shape = 's32[1]{0}', space=sflag, size = 0x4, scoped, tag = 'scoped memory for tpu_custom_call.1']
    %10 = vsyncpa [#allocation3], 0
    // Predicated region
    $region2: #{tpu_custom_call.1} parent=1 // pred_check
      _
    $region3: #{tpu_custom_call.1} parent=1 // pred_check_branch
      %12 = sbr.rel (0) target = $region5
    $region4: #{tpu_custom_call.1} parent=1 // pred_region
      _
    $region5: #{tpu_custom_call.1} parent=1 // pred_fallthru
      _
    // Predicated region
    $region6: #{tpu_custom_call.1} parent=1 // pred_check
      _
    $region7: #{tpu_custom_call.1} parent=1 // pred_check_branch
      %14 = sbr.rel (0) target = $region9
    $region8: #{tpu_custom_call.1} parent=1 // pred_region
      _
    $region9: #{tpu_custom_call.1} parent=1 // pred_fallthru
      _
    // Predicated region
    $region10: #{tpu_custom_call.1} parent=1 // pred_check
      _
    $region11: #{tpu_custom_call.1} parent=1 // pred_check_branch
      %16 = sbr.rel (0) target = $region13
    $region12: #{tpu_custom_call.1} parent=1 // pred_region
      _
    $region13: #{tpu_custom_call.1} parent=1 // pred_fallthru
      _
    // Predicated region
    $region14: #{tpu_custom_call.1} parent=1 // pred_check
      _
    $region15: #{tpu_custom_call.1} parent=1 // pred_check_branch
      %18 = sbr.rel (0) target = $region17
    $region16: #{tpu_custom_call.1} parent=1 // pred_region
      _
    $region17: #{tpu_custom_call.1} parent=1 // pred_fallthru
      _
    // Predicated region
    $region18: #{tpu_custom_call.1} parent=1 // pred_check
      _
    $region19: #{tpu_custom_call.1} parent=1 // pred_check_branch
      %20 = sbr.rel (0) target = $region21
    $region20: #{tpu_custom_call.1} parent=1 // pred_region
      _
    $region21: #{tpu_custom_call.1} parent=1 // pred_fallthru
      _
    %v22 = vld [vmem:[%s1] sm:$0xf]
    %v23 = vld [vmem:[%s1 + $0x4] sm:$0x1]
    %v24 = vld [vmem:[%s0] sm:$0xf]
    %v25 = vld [vmem:[%s0 + $0x4] sm:$0xf]
    %v26 = vld [vmem:[%s0 + $0x8] sm:$0xf]
    %v27 = vld [vmem:[%s0 + $0xc] sm:$0xf]
    %v28 = vld [vmem:[%s0 + $0x10] sm:$0xf]
    %v29 = vld [vmem:[%s0 + $0x14] sm:$0xf]
    %v30 = vld [vmem:[%s0 + $0x18] sm:$0xf]
    %v31 = vld [vmem:[%s0 + $0x1c] sm:$0xf]
    %v32 = vld [vmem:[%s0 + $0x20] sm:$0xf]
    %v33 = vld [vmem:[%s0 + $0x24] sm:$0xf]
    %v34 = vld [vmem:[%s0 + $0x28] sm:$0xf]
    %v35 = vld [vmem:[%s0 + $0x2c] sm:$0xf]
    %v36 = vld [vmem:[%s0 + $0x30] sm:$0xf]
    %v37 = vld [vmem:[%s0 + $0x34] sm:$0xf]
    %v38 = vld [vmem:[%s0 + $0x38] sm:$0xf]
    %v39 = vld [vmem:[%s0 + $0x3c] sm:$0xf]
    %v40 = vld [vmem:[%s2] sm:$0xff]
    %v41 = vld [vmem:[%s2 + $0x8] sm:$0x3]
    %43 = vset.pattern.permute.xlu0 0
    %44 = vperm.xlu0 %43, %v40
    %v45 = vpop.permute.xlu0 %44
    %48 = vset.pattern.permute.xlu0 0
    %49 = vperm.xlu0 %48, %v41
    %v50 = vpop.permute.xlu0 %49
    %v54 = vunpack.c.l.b16 %v22
    %v55 = vunpack.c.l.b16 %v23
    %v56 = vpack.c.b16 %v55, %v54
    %v73 = vunpack.c.l.b16 %v24
    %v74 = vunpack.c.l.b16 %v25
    %v75 = vunpack.c.l.b16 %v26
    %v76 = vunpack.c.l.b16 %v27
    %v77 = vunpack.c.l.b16 %v28
    %v78 = vunpack.c.l.b16 %v29
    %v79 = vunpack.c.l.b16 %v30
    %v80 = vunpack.c.l.b16 %v31
    %v81 = vunpack.c.l.b16 %v32
    %v82 = vunpack.c.l.b16 %v33
    %v83 = vunpack.c.l.b16 %v34
    %v84 = vunpack.c.l.b16 %v35
    %v85 = vunpack.c.l.b16 %v36
    %v86 = vunpack.c.l.b16 %v37
    %v87 = vunpack.c.l.b16 %v38
    %v88 = vunpack.c.l.b16 %v39
    %v89 = vpack.c.b16 %v74, %v73
    %v90 = vpack.c.b16 %v76, %v75
    %v91 = vpack.c.b16 %v78, %v77
    %v92 = vpack.c.b16 %v80, %v79
    %v93 = vpack.c.b16 %v82, %v81
    %v94 = vpack.c.b16 %v84, %v83
    %v95 = vpack.c.b16 %v86, %v85
    %v96 = vpack.c.b16 %v88, %v87
    %vm97 = vcmask 162816
    %v99 = vsel %vm97, %v56, 0
    %v102 = vsel %vm97, %v89, 0
    %v105 = vsel %vm97, %v90, 0
    %v108 = vsel %vm97, %v91, 0
    %v111 = vsel %vm97, %v92, 0
    %v114 = vsel %vm97, %v93, 0
    %v117 = vsel %vm97, %v94, 0
    %v120 = vsel %vm97, %v95, 0
    %v123 = vsel %vm97, %v96, 0
    %125 = vmatpush.bf16.xpose.msra.mxu0 %v123
    %126 = vmatpush.bf16.xpose.msra.mxu0 %v120
    %127 = vmatpush.bf16.xpose.msra.mxu0 %v117
    %128 = vmatpush.bf16.xpose.msra.mxu0 %v114
    %129 = vmatpush.bf16.xpose.msra.mxu0 %v111
    %130 = vmatpush.bf16.xpose.msra.mxu0 %v108
    %131 = vmatpush.bf16.xpose.msra.mxu0 %v105
    %132 = vmatpush.bf16.xpose.msra.mxu0 %v102
    %133 = vmatmul.bf16.gmra.mxu0 %v99
    %v134 = vpop.f32.mrf.mxu0
    %v135 = vadd.f32 %v45, %v134
    %v136 = vpop.f32.mrf.mxu0
    %v137 = vadd.f32 %v50, %v136
    %138 = vdwg.mxu0
    %v139 = vmax.f32 %v135, 0.0
    %v140 = vmax.f32 %v137, 0.0
    %v141 = vld [vmem:[%s3] sm:$0x1]
    %v142 = vpack.c.bf16 %v140, %v139
    %v143 = vld [vmem:[%s4] sm:$0x3]
    %145 = vset.pattern.permute.xlu0 0
    %146 = vperm.xlu0 %145, %v143
    %v147 = vpop.permute.xlu0 %146
    %vm149 = vcmask 80896
    %v151 = vsel %vm149, %v141, 0
    %vm153 = vcmask 1044480
    %v155 = vsel %vm153, %v142, 0
    %157 = vmatpush.bf16.msra.mxu0 0
    %158 = vmatpush.bf16.msra.mxu0 0
    %159 = vmatpush.bf16.msra.mxu0 0
    %160 = vmatpush.bf16.msra.mxu0 0
    %161 = vmatpush.bf16.msra.mxu0 0
    %162 = vmatpush.bf16.msra.mxu0 0
    %163 = vmatpush.bf16.msra.mxu0 0
    %164 = vmatpush.bf16.msra.mxu0 %v155
    %165 = vmatmul.bf16.gmra.mxu0 %v151
    %v166 = vpop.f32.mrf.mxu0
    %v167 = vadd.f32 %v147, %v166
    %v168 = vpop.f32.mrf.mxu0
    %169 = vdwg.mxu0
    %170 = vst [vmem:[#allocation2] sm:$0x3] %v167
    // Predicated region
    $region22: #{tpu_custom_call.1} parent=1 // pred_check
      _
    $region23: #{tpu_custom_call.1} parent=1 // pred_check_branch
      %172 = sbr.rel (0) target = $region25
    $region24: #{tpu_custom_call.1} parent=1 // pred_region
      %174 = vsyncadd [#allocation3], 0
      %s176 = sshll.u32 [#allocation2], 4
      %s177 = int_to_ptr.vmem [resolvable:$true] %s176
      %s178 = sshll.u32 %s5, 4
      %s179 = int_to_ptr.hbm [resolvable:$true] %s178
      %181 = dma.vmem_to_hbm [thread:$0]  %s177, 32, %s179, [#allocation3]
    $region25: #{tpu_custom_call.1} parent=1 // pred_fallthru
      _
    // Predicated region
    $region26: #{tpu_custom_call.1} parent=1 // pred_check
      _
    $region27: #{tpu_custom_call.1} parent=1 // pred_check_branch
      %183 = sbr.rel (0) target = $region29
    $region28: #{tpu_custom_call.1} parent=1 // pred_region
      %185 = dma.done [#allocation3], 32
    $region29: #{tpu_custom_call.1} parent=1 // pred_fallthru
      _
    %186 = vsyncpa [#allocation3], 1

</llo_original>
